<compile_context>
chip_gen: v7x
topology: tpu7x:2x2x1
jax: 0.10.0
libtpu: 0.0.40
codegen_flags: <defaults>
</compile_context>

<pallas_src>
import functools

import jax
import jax.numpy as jnp
from jax.experimental import pallas as pl
from jax.experimental.pallas import tpu as pltpu


def _round_up(a, b):
    return ((a + b - 1) // b) * b


def _pick_tile(dim, unit, cap):
    """Largest multiple of `unit` that divides `dim` and is <= cap."""
    cap = max(unit, min(cap, dim))
    best = unit
    t = unit
    while t <= cap:
        if dim % t == 0:
            best = t
        t += unit
    return best


def _choose_tile(dim, unit, cap, override, full_ok_limit):
    """Return (tile, padded_dim) for one matmul dimension.

    Preference order: user override; a divisor tile (no padding); a single
    full-extent block (no padding, Mosaic masks the ragged tail in-kernel);
    only for very large unaligned dims, pad up to a multiple of `unit`.
    """
    if override is not None:
        return override, _round_up(dim, override)
    if dim % unit == 0:
        return _pick_tile(dim, unit, cap), dim
    if dim <= full_ok_limit:
        return dim, dim
    dp = _round_up(dim, unit)
    return _pick_tile(dp, unit, cap), dp


def _device_kind():
    try:
        return jax.devices()[0].device_kind.lower()
    except Exception:  # pragma: no cover - defensive
        return ""


def _make_fc_kernel(has_bias, use_scratch):
    """Kernel factory: (x, W[, bias], out[, acc_scratch]) refs."""

    def kernel(*refs):
        x_ref = refs[0]
        w_ref = refs[1]
        pos = 2
        b_ref = None
        if has_bias:
            b_ref = refs[pos]
            pos += 1
        o_ref = refs[pos]
        acc_ref = refs[pos + 1] if use_scratch else o_ref

        k = pl.program_id(2)

        @pl.when(k == 0)
        def _init():
            acc_ref[...] = jnp.zeros_like(acc_ref)

        # MXU matmul with f32 accumulation into the resident tile.
        acc_ref[...] += jnp.dot(x_ref[...], w_ref[...],
                                preferred_element_type=jnp.float32)

        if has_bias or use_scratch:
            @pl.when(k == pl.num_programs(2) - 1)
            def _finalize():
                res = acc_ref[...]
                if has_bias:
                    res = res + b_ref[...].astype(jnp.float32)
                o_ref[...] = res.astype(o_ref.dtype)

    return kernel


@functools.partial(jax.jit, static_argnames=("tm", "tn", "tk", "mxu_bf16"))
def fully_connect1_forward(x, weights, bias=None, *, tm=None, tn=None, tk=None,
                           mxu_bf16=False):
    """Pallas implementation of Fully_Connect1.forward.

    x:       (M, K)
    weights: (K, N)
    bias:    (N,) or None (module built with bias=False)
    returns: (M, N) in x.dtype

    mxu_bf16=True casts operands to bf16 (faster/lower HBM traffic, reduced
    precision vs. the PyTorch f32 mm).  For repeated calls pre-cast the
    weights once so the per-call cast is a no-op.
    """
    M, K = x.shape
    K2, N = weights.shape
    assert K == K2, "in_features mismatch"
    out_dtype = x.dtype
    has_bias = bias is not None
    user_tiles = (tm is not None) or (tn is not None) or (tk is not None)

    # ---- operand dtype ------------------------------------------------------
    in_dtype = jnp.bfloat16 if mxu_bf16 else x.dtype
    x_in = x if x.dtype == in_dtype else x.astype(in_dtype)
    w_in = weights if weights.dtype == in_dtype else weights.astype(in_dtype)

    # ---- generation hints ---------------------------------------------------
    kind = _device_kind()
    is_v7x = ("7x" in kind) or ("v7" in kind)
    vmem_cap = (100 << 20) if ("v5" in kind or "v6" in kind) else (56 << 20)

    # ---- tile selection (divisor-friendly; no gratuitous padding) ----------
    tm_cap = 1024 if M >= 1024 else 512
    tn_cap = 1024 if N >= 1024 else 512
    tk_cap = 1024 if K >= 1024 else 512

    tm, Mp = _choose_tile(M, 8,   tm_cap, tm, full_ok_limit=1024)
    tk, Kp = _choose_tile(K, 128, tk_cap, tk, full_ok_limit=2048)
    tn, Np = _choose_tile(N, 128, tn_cap, tn, full_ok_limit=2048)

    # v7x only: if the parallel (i, j) grid collapsed to one block, split so
    # both TensorCores get work.  Skipped on 1-TC v5e/v6e where it just adds
    # grid steps.
    if is_v7x and not user_tiles and (Mp // tm) * (Np // tn) == 1:
        if Np % 256 == 0:
            tn = Np // 2
        elif Mp % 16 == 0 and Mp >= 16:
            tm = Mp // 2

    # ---- padding (only when a dim could not be covered exactly) ------------
    # Padded K rows/cols MUST be zero so the reduction is exact.
    if (Mp, Kp) != (M, K):
        x_in = jnp.pad(x_in, ((0, Mp - M), (0, Kp - K)))
    if (Kp, Np) != (K, N):
        w_in = jnp.pad(w_in, ((0, Kp - K), (0, Np - N)))

    operands = [x_in, w_in]
    in_specs = [
        pl.BlockSpec((tm, tk), lambda i, j, k: (i, k)),   # x tile
        pl.BlockSpec((tk, tn), lambda i, j, k: (k, j)),   # W tile
    ]
    if has_bias:
        b_in = bias.astype(jnp.float32)
        if Np != N:
            b_in = jnp.pad(b_in, (0, Np - N))
        operands.append(b_in.reshape(1, Np))
        # bias block index is k-independent -> not re-DMA'd over the reduction
        in_specs.append(pl.BlockSpec((1, tn), lambda i, j, k: (0, j)))

    # f32 outputs accumulate directly in the resident output tile; narrower
    # output dtypes accumulate in a f32 VMEM scratch and cast on the last k.
    use_scratch = jnp.dtype(out_dtype) != jnp.dtype(jnp.float32)
    scratch_shapes = [pltpu.VMEM((tm, tn), jnp.float32)] if use_scratch else []

    grid = (Mp // tm, Np // tn, Kp // tk)

    # ---- VMEM budget: double-buffered inputs + resident output tile --------
    in_bytes = jnp.dtype(in_dtype).itemsize
    out_bytes = jnp.dtype(out_dtype).itemsize
    vmem_need = (2 * (tm * tk + tk * tn) * in_bytes
                 + 2 * tm * tn * out_bytes
                 + (tm * tn * 4 if use_scratch else 0)
                 + (2 * tn * 4 if has_bias else 0))
    vmem_limit = int(min(max(32 << 20, int(1.5 * vmem_need)), vmem_cap))

    n_i, n_j = Mp // tm, Np // tn
    cost = pl.CostEstimate(
        flops=2 * M * N * K,
        transcendentals=0,
        bytes_accessed=int(Mp * Kp * in_bytes * n_j          # x re-streamed per j
                           + Kp * Np * in_bytes * n_i        # W re-streamed per i
                           + Mp * Np * out_bytes
                           + (Np * 4 * n_i if has_bias else 0)),
    )

    out = pl.pallas_call(
        _make_fc_kernel(has_bias, use_scratch),
        out_shape=jax.ShapeDtypeStruct((Mp, Np), out_dtype),
        grid_spec=pltpu.PrefetchScalarGridSpec(
            num_scalar_prefetch=0,
            grid=grid,
            in_specs=in_specs,
            out_specs=pl.BlockSpec((tm, tn), lambda i, j, k: (i, j)),
            scratch_shapes=scratch_shapes,
        ),
        compiler_params=pltpu.CompilerParams(
            dimension_semantics=("parallel", "parallel", "arbitrary"),
            vmem_limit_bytes=vmem_limit,
        ),
        cost_estimate=cost,
    )(*operands)

    if (Mp, Np) != (M, N):
        out = out[:M, :N]
    return out


def init_fully_connect1(key, in_features, out_features, bias=False):
    """Matches the PyTorch init: kaiming_normal_(mode='fan_out', relu) on an
    (in, out) tensor -> fan_out = in_features, std = sqrt(2 / in_features);
    bias filled with 0 when enabled."""
    std = (2.0 / in_features) ** 0.5
    w = jax.random.normal(key, (in_features, out_features), jnp.float32) * std
    b = jnp.zeros((out_features,), jnp.float32)
    return w, b, bias


if __name__ == "__main__":
    key = jax.random.PRNGKey(0)
    k1, k2, k3, k4 = jax.random.split(key, 4)

    # ---- test 1: small MNIST-ish layer, no bias ----------------------------
    batch, in_features, out_features = 8, 32, 64
    x = jax.random.normal(k1, (batch, in_features), jnp.float32)
    w, b, use_bias = init_fully_connect1(k2, in_features, out_features, bias=False)
    out = jax.block_until_ready(fully_connect1_forward(x, w, b if use_bias else None))
    ref = jnp.dot(x, w, preferred_element_type=jnp.float32)
    assert out.shape == (batch, out_features)
    assert jnp.allclose(out, ref, atol=5e-2, rtol=2e-2)

    # ---- test 2: ragged shapes + bias (full-extent blocks, no padding) -----
    batch2, in2, out2 = 24, 200, 136
    x2 = jax.random.normal(k3, (batch2, in2), jnp.float32)
    w2, b2, use_bias2 = init_fully_connect1(k4, in2, out2, bias=True)
    out_2 = jax.block_until_ready(fully_connect1_forward(x2, w2, b2 if use_bias2 else None))
    ref2 = jnp.dot(x2, w2, preferred_element_type=jnp.float32) + b2[None, :]
    assert out_2.shape == (batch2, out2)
    assert jnp.allclose(out_2, ref2, atol=5e-2, rtol=2e-2)

    # ---- test 3: explicit tiles to exercise a multi-step reduction grid ----
    batch3, in3, out3 = 16, 512, 256
    x3 = jax.random.normal(k1, (batch3, in3), jnp.float32)
    w3, b3, _ = init_fully_connect1(k2, in3, out3, bias=True)
    out_3 = jax.block_until_ready(
        fully_connect1_forward(x3, w3, b3, tm=16, tn=128, tk=128))
    ref3 = jnp.dot(x3, w3, preferred_element_type=jnp.float32) + b3[None, :]
    assert out_3.shape == (batch3, out3)
    assert jnp.allclose(out_3, ref3, atol=5e-2, rtol=2e-2)

    print("KERNEL_OK")
</pallas_src>

<mosaic_0001>
module attributes {stable_mosaic.version = 11 : i64} {
  func.func @kernel(%arg0: i32, %arg1: i32, %arg2: i32, %arg3: memref<8x32xf32, #tpu.memory_space<vmem>>, %arg4: memref<32x64xf32, #tpu.memory_space<vmem>>, %arg5: memref<8x64xf32, #tpu.memory_space<vmem>>) attributes {dimension_semantics = [#tpu.dimension_semantics<parallel>, #tpu.dimension_semantics<parallel>, #tpu.dimension_semantics<arbitrary>], iteration_bounds = array<i64: 1, 1, 1>, scalar_prefetch = 0 : i64, scratch_operands = 0 : i64, tpu.core_type = #tpu.core_type<tc>, window_params = [{transform_indices = @transform_0, window_bounds = array<i64: 8, 32>}, {transform_indices = @transform_1, window_bounds = array<i64: 32, 64>}, {transform_indices = @transform_2, window_bounds = array<i64: 8, 64>}]} {
    %c0_i32 = arith.constant 0 : i32
    %0 = arith.cmpi eq, %arg2, %c0_i32 : i32
    %1 = arith.extui %0 : i1 to i32
    %c0_i32_0 = arith.constant 0 : i32
    %2 = arith.cmpi ne, %1, %c0_i32_0 : i32
    scf.if %2 {
      %cst_8 = arith.constant 0.000000e+00 : f32
      %9 = vector.broadcast %cst_8 : f32 to vector<8x64xf32>
      %c0_9 = arith.constant 0 : index
      %c0_10 = arith.constant 0 : index
      %10 = vector.load %arg5[%c0_9, %c0_10] : memref<8x64xf32, #tpu.memory_space<vmem>>, vector<8x64xf32>
      tpu.vector_store %arg5[%c0_9, %c0_10], %9 {strides = array<i32>} : memref<8x64xf32, #tpu.memory_space<vmem>>, vector<8x64xf32>,
    } else {
    }
    %c0 = arith.constant 0 : index
    %c0_1 = arith.constant 0 : index
    %3 = vector.load %arg5[%c0, %c0_1] : memref<8x64xf32, #tpu.memory_space<vmem>>, vector<8x64xf32>
    %c0_2 = arith.constant 0 : index
    %c0_3 = arith.constant 0 : index
    %4 = vector.load %arg3[%c0_2, %c0_3] : memref<8x32xf32, #tpu.memory_space<vmem>>, vector<8x32xf32>
    %c0_4 = arith.constant 0 : index
    %c0_5 = arith.constant 0 : index
    %5 = vector.load %arg4[%c0_4, %c0_5] : memref<32x64xf32, #tpu.memory_space<vmem>>, vector<32x64xf32>
    %cst = arith.constant dense<0.000000e+00> : vector<8x64xf32>
    %6 = tpu.matmul %4, %5, %cst {dimension_numbers = #tpu.dot_dimension_numbers<[1], [0], [0], [1], [0, 0, 1, 1], [], []>} : vector<8x32xf32>, vector<32x64xf32>, vector<8x64xf32> -> vector<8x64xf32>
    %7 = arith.addf %3, %6 : vector<8x64xf32>
    %c0_6 = arith.constant 0 : index
    %c0_7 = arith.constant 0 : index
    %8 = vector.load %arg5[%c0_6, %c0_7] : memref<8x64xf32, #tpu.memory_space<vmem>>, vector<8x64xf32>
    tpu.vector_store %arg5[%c0_6, %c0_7], %7 {strides = array<i32>} : memref<8x64xf32, #tpu.memory_space<vmem>>, vector<8x64xf32>,
    return
  }
  func.func @transform_0(%arg0: i32, %arg1: i32, %arg2: i32) -> (i32, i32) {
    %c0_i32 = arith.constant 0 : i32
    return %arg0, %arg2 : i32, i32
  }
  func.func @transform_1(%arg0: i32, %arg1: i32, %arg2: i32) -> (i32, i32) {
    %c0_i32 = arith.constant 0 : i32
    return %arg2, %arg1 : i32, i32
  }
  func.func @transform_2(%arg0: i32, %arg1: i32, %arg2: i32) -> (i32, i32) {
    %c0_i32 = arith.constant 0 : i32
    return %arg0, %arg1 : i32, i32
  }
}

</mosaic_0001>

<llo_original>
// kernel: fully_connect1_forward.1
$region0: #{fully_connect1_forward.1}
  #allocation0 [shape = 'u32[]', space=smem, size = 0x4, offset = 0x4, fixed_abs, tag = 'smem constant byte address 0x4 - core index']
  #allocation1 [shape = 'u32[144,128]{1,0:T(1,128)}', space=vmem, size = 0x12000, scoped, tag = 'internal scratch']
  %s0 = inlined_call_operand.hbm [shape: f32[8,32], index: 0, kind: input, shape index: {}]
  %s1 = inlined_call_operand.hbm [shape: f32[32,64], index: 1, kind: input, shape index: {}]
  %s2 = inlined_call_operand.hbm [shape: f32[8,64], index: 2, kind: output, shape index: {}]
  %s3 = sld [smem:[#allocation0]]
  $region30: #{fully_connect1_forward.1} parent=0
    _
  %s5 = ssub.s32 1, %s3
  %s6 = scalar_select 0, %s5, %s3
  $region1: #{fully_connect1_forward.1} parent=0
    #allocation2 [shape = 'u8[4096]{0}', space=vmem, size = 0x1000, scoped, tag = 'input window, operand 0, single buffered']
    #allocation3 [shape = 's32[1]{0}', space=sflag, size = 0x4, scoped, tag = 'scoped memory for fully_connect1_forward.1']
    #allocation4 [shape = 's32[1]{0}', space=sflag, size = 0x4, scoped, tag = 'scoped memory for fully_connect1_forward.1']
    #allocation5 [shape = 'u8[16384]{0}', space=vmem, size = 0x4000, scoped, tag = 'input window, operand 1, single buffered']
    #allocation6 [shape = 's32[1]{0}', space=sflag, size = 0x4, scoped, tag = 'scoped memory for fully_connect1_forward.1']
    #allocation7 [shape = 'u8[4096]{0}', space=vmem, size = 0x1000, scoped, tag = 'output window, operand 0, single buffered']
    %7 = vsyncpa [#allocation3], 0
    %8 = vsyncpa [#allocation6], 0
    %9 = vsyncpa [#allocation4], 0
    // Predicated region
    $region2: #{fully_connect1_forward.1} parent=1 // pred_check
      _
    $region3: #{fully_connect1_forward.1} parent=1 // pred_check_branch
      %11 = sbr.rel (0) target = $region5
    $region4: #{fully_connect1_forward.1} parent=1 // pred_region
      %s13 = ssub.s32 128, 128
      %14 = vsyncadd [#allocation3], %s13
      %s16 = sshll.u32 [#allocation2], 4
      %s17 = int_to_ptr.vmem [resolvable:$true] %s16
      %19 = dma.hbm_to_vmem [thread:$0]  %s0, 128, %s17, [#allocation3]
    $region5: #{fully_connect1_forward.1} parent=1 // pred_fallthru
      _
    // Predicated region
    $region6: #{fully_connect1_forward.1} parent=1 // pred_check
      _
    $region7: #{fully_connect1_forward.1} parent=1 // pred_check_branch
      %21 = sbr.rel (0) target = $region9
    $region8: #{fully_connect1_forward.1} parent=1 // pred_region
      %s23 = ssub.s32 512, 512
      %24 = vsyncadd [#allocation6], %s23
      %s25 = sshll.u32 [#allocation5], 4
      %s26 = int_to_ptr.vmem [resolvable:$true] %s25
      %31 = dma.hbm_to_vmem [thread:$0]  %s1, 512, %s26, [#allocation6], 128, 128, 8
    $region9: #{fully_connect1_forward.1} parent=1 // pred_fallthru
      _
    // Predicated region
    $region10: #{fully_connect1_forward.1} parent=1 // pred_check
      _
    $region11: #{fully_connect1_forward.1} parent=1 // pred_check_branch
      %33 = sbr.rel (0) target = $region13
    $region12: #{fully_connect1_forward.1} parent=1 // pred_region
      %34 = dma.done [#allocation3], 128
    $region13: #{fully_connect1_forward.1} parent=1 // pred_fallthru
      _
    // Predicated region
    $region14: #{fully_connect1_forward.1} parent=1 // pred_check
      _
    $region15: #{fully_connect1_forward.1} parent=1 // pred_check_branch
      %36 = sbr.rel (0) target = $region17
    $region16: #{fully_connect1_forward.1} parent=1 // pred_region
      %37 = dma.done [#allocation6], 512
    $region17: #{fully_connect1_forward.1} parent=1 // pred_fallthru
      _
    %p38 = scmp.eq.s32.totalorder 0, 0
    // Predicated region
    $region18: #{fully_connect1_forward.1} parent=1 // pred_check
      %p39 = pneg %p38
    $region19: #{fully_connect1_forward.1} parent=1 // pred_check_branch
      %41 = sbr.rel (%p39) target = $region21
    $region20: #{fully_connect1_forward.1} parent=1 // pred_region
      %vm42 = vcmask 523264
      %43 = vst.msk [vmem:[#allocation7] sm:$0xff] %vm42, 0.0
    $region21: #{fully_connect1_forward.1} parent=1 // pred_fallthru
      _
    %v44 = vld [vmem:[#allocation7] sm:$0xff]
    %v45 = vld [vmem:[#allocation2] sm:$0xff]
    %v46 = vld [vmem:[#allocation5] sm:$0xff]
    %v47 = vld [vmem:[#allocation5 + $0x8] sm:$0xff]
    %v48 = vld [vmem:[#allocation5 + $0x10] sm:$0xff]
    %v49 = vld [vmem:[#allocation5 + $0x18] sm:$0xff]
    %vm50 = vcmask 261120
    %v52 = vsel %vm50, %v45, 0
    %54 = vmatprep.subr.mxu0 0.0
    %55 = vmatpush1.msra.mxu0 %v46
    %56 = vmatprep.subr.mxu0 0.0
    %57 = vmatpush1.msra.mxu0 %v47
    %58 = vmatprep.subr.mxu0 0.0
    %59 = vmatpush1.msra.mxu0 %v48
    %60 = vmatprep.subr.mxu0 0.0
    %61 = vmatpush1.msra.mxu0 %v49
    %62 = vmatprep.subr.mxu0 0.0
    %63 = vmatpush1.msra.mxu0 0.0
    %64 = vmatprep.subr.mxu0 0.0
    %65 = vmatpush1.msra.mxu0 0.0
    %66 = vmatprep.subr.mxu0 0.0
    %67 = vmatpush1.msra.mxu0 0.0
    %68 = vmatprep.subr.mxu0 0.0
    %69 = vmatpush1.msra.mxu0 0.0
    %70 = vmatprep.subr.mxu0 0.0
    %71 = vmatpush1.msra.mxu0 0.0
    %72 = vmatprep.subr.mxu0 0.0
    %73 = vmatpush1.msra.mxu0 0.0
    %74 = vmatprep.subr.mxu0 0.0
    %75 = vmatpush1.msra.mxu0 0.0
    %76 = vmatprep.subr.mxu0 0.0
    %77 = vmatpush1.msra.mxu0 0.0
    %78 = vmatprep.subr.mxu0 0.0
    %79 = vmatpush1.msra.mxu0 0.0
    %80 = vmatprep.subr.mxu0 0.0
    %81 = vmatpush1.msra.mxu0 0.0
    %82 = vmatprep.subr.mxu0 0.0
    %83 = vmatpush1.msra.mxu0 0.0
    %84 = vmatprep.subr.mxu0 0.0
    %85 = vmatpush1.msra.mxu0 0.0
    %86 = vmatprep.subr.mxu0 0.0
    %87 = vmatpush1.msra.mxu0 0.0
    %88 = vmatprep.subr.mxu0 0.0
    %89 = vmatpush1.msra.mxu0 0.0
    %90 = vmatprep.subr.mxu0 0.0
    %91 = vmatpush1.msra.mxu0 0.0
    %92 = vmatprep.subr.mxu0 0.0
    %93 = vmatpush1.msra.mxu0 0.0
    %94 = vmatprep.subr.mxu0 0.0
    %95 = vmatpush1.msra.mxu0 0.0
    %96 = vmatprep.subr.mxu0 0.0
    %97 = vmatpush1.msra.mxu0 0.0
    %98 = vmatprep.subr.mxu0 0.0
    %99 = vmatpush1.msra.mxu0 0.0
    %100 = vmatprep.subr.mxu0 0.0
    %101 = vmatpush1.msra.mxu0 0.0
    %102 = vmatprep.subr.mxu0 0.0
    %103 = vmatpush1.msra.mxu0 0.0
    %104 = vmatprep.subr.mxu0 0.0
    %105 = vmatpush1.msra.mxu0 0.0
    %106 = vmatprep.subr.mxu0 0.0
    %107 = vmatpush1.msra.mxu0 0.0
    %108 = vmatprep.subr.mxu0 0.0
    %109 = vmatpush1.msra.mxu0 0.0
    %110 = vmatprep.subr.mxu0 0.0
    %111 = vmatpush1.msra.mxu0 0.0
    %112 = vmatprep.subr.mxu0 0.0
    %113 = vmatpush1.msra.mxu0 0.0
    %114 = vmatprep.subr.mxu0 0.0
    %115 = vmatpush1.msra.mxu0 0.0
    %116 = vmatprep.subr.mxu0 0.0
    %117 = vmatpush1.msra.mxu0 0.0
    %118 = vmatprep.mubr.f32.mxu0 0.0
    %119 = vmatmul.mubr.f32.gmra.mrb[0].mxu0 %v52
    %v120 = vpop.f32.mrb[0].mxu0
    %v121 = vadd.f32 0.0, %v120
    %v122 = vpop.f32.mrb[0].mxu0
    %123 = vdwg.mxu0
    %v124 = vadd.f32 %v44, %v121
    %vm125 = vcmask 523264
    %126 = vst.msk [vmem:[#allocation7] sm:$0xff] %vm125, %v124
    // Predicated region
    $region22: #{fully_connect1_forward.1} parent=1 // pred_check
      _
    $region23: #{fully_connect1_forward.1} parent=1 // pred_check_branch
      %128 = sbr.rel (0) target = $region25
    $region24: #{fully_connect1_forward.1} parent=1 // pred_region
      %s130 = ssub.s32 128, 128
      %131 = vsyncadd [#allocation4], %s130
      %s133 = sshll.u32 [#allocation7], 4
      %s134 = int_to_ptr.vmem [resolvable:$true] %s133
      %136 = dma.vmem_to_hbm [thread:$0]  %s134, 128, %s2, [#allocation4]
    $region25: #{fully_connect1_forward.1} parent=1 // pred_fallthru
      _
    // Predicated region
    $region26: #{fully_connect1_forward.1} parent=1 // pred_check
      _
    $region27: #{fully_connect1_forward.1} parent=1 // pred_check_branch
      %138 = sbr.rel (0) target = $region29
    $region28: #{fully_connect1_forward.1} parent=1 // pred_region
      %139 = dma.done [#allocation4], 128
    $region29: #{fully_connect1_forward.1} parent=1 // pred_fallthru
      _
    %140 = vsyncpa [#allocation3], 1
    %141 = vsyncpa [#allocation6], 1
    %142 = vsyncpa [#allocation4], 1

</llo_original>
